<compile_context>
chip_gen: v6e
topology: v6e:2x2x1
jax: 0.10.0
libtpu: 0.0.40
codegen_flags: <defaults>
</compile_context>

<pallas_src>
import jax
import jax.numpy as jnp
from jax.experimental import pallas as pl
from jax.experimental.pallas import tpu as pltpu


# ----------------------------------------------------------------------------
# Pallas kernel: conv1d(k=3, pad=1) + maxpool(L) + bias + relu, batch-blocked
# ----------------------------------------------------------------------------
def _conv_relu_maxpool_kernel(x_ref, w_ref, b_ref, o_ref):
    # x_ref: (BB, L, D)   bf16 embeddings
    # w_ref: (3, D, Hp)   bf16 conv weight, tap-major, H zero-padded to Hp
    # b_ref: (1, Hp)      f32 bias (zero-padded)
    # o_ref: (BB, Hp)     f32 pooled output
    BB, L, D = x_ref.shape
    Hp = o_ref.shape[1]
    M = BB * L

    # flatten batch*length into the MXU M dimension
    xf = x_ref[...].reshape(M, D)                                       # (M, D) bf16

    # conv1d(k=3, pad=1) as three (M, D) @ (D, Hp) matmuls on the same operand
    c0 = jnp.dot(xf, w_ref[0], preferred_element_type=jnp.float32)      # tap x[l-1]
    c1 = jnp.dot(xf, w_ref[1], preferred_element_type=jnp.float32)      # tap x[l]
    c2 = jnp.dot(xf, w_ref[2], preferred_element_type=jnp.float32)      # tap x[l+1]

    # align the off-center taps: output row m needs c0[m-1] and c2[m+1]
    zrow = jnp.zeros((1, Hp), jnp.float32)
    c0s = jnp.concatenate([zrow, c0[:M - 1, :]], axis=0)                 # row m <- c0[m-1]
    c2s = jnp.concatenate([c2[1:, :], zrow], axis=0)                     # row m <- c2[m+1]

    # mask taps that would cross a sentence boundary (== the zero-pad rows)
    l_idx = jax.lax.broadcasted_iota(jnp.int32, (M, 1), 0) % L
    acc = c1 + jnp.where(l_idx > 0, c0s, 0.0) + jnp.where(l_idx < L - 1, c2s, 0.0)

    # max-pool over length, then bias + ReLU (equivalent, cheaper after pool)
    pooled = jnp.max(acc.reshape(BB, L, Hp), axis=1)                     # (BB, Hp)
    o_ref[...] = jnp.maximum(pooled + b_ref[...], 0.0)


def cnn_encoder_pallas(x_emb, conv_w, conv_b, block_b=None):
    """x_emb: (B, L, D) float; conv_w: (H, D, 3) [torch layout]; conv_b: (H,)."""
    B, L, D = x_emb.shape
    H = conv_w.shape[0]
    H_pad = ((H + 127) // 128) * 128

    # batch block: aim for ~512 flattened rows per step; keep BB a multiple of
    # 8 when blocking so the output block's sublane dim stays aligned.
    if block_b is None:
        cap = max(8, ((512 // max(L, 1)) // 8) * 8)
        block_b = B if B <= cap else cap
    n_blocks = pl.cdiv(B, block_b)
    B_pad = n_blocks * block_b
    if B_pad != B:
        x_emb = jnp.pad(x_emb, ((0, B_pad - B), (0, 0), (0, 0)))

    # bf16 inputs, f32 accumulate (safe: max-pool head, small K)
    x_bf = x_emb.astype(jnp.bfloat16)                                    # (B_pad, L, D)
    # torch conv weight (H, D, 3) -> (3, D, H_pad), zero-padded along H (lanes)
    w = jnp.transpose(conv_w, (2, 1, 0)).astype(jnp.bfloat16)            # (3, D, H)
    w = jnp.pad(w, ((0, 0), (0, 0), (0, H_pad - H)))
    b = jnp.pad(conv_b.astype(jnp.float32), (0, H_pad - H)).reshape(1, H_pad)

    cost = pl.CostEstimate(
        flops=2 * B_pad * L * 3 * D * H_pad,
        transcendentals=0,
        bytes_accessed=(B_pad * L * D * 2) + (3 * D * H_pad * 2)
                       + (H_pad * 4) + (B_pad * H_pad * 4),
    )

    out = pl.pallas_call(
        _conv_relu_maxpool_kernel,
        out_shape=jax.ShapeDtypeStruct((B_pad, H_pad), jnp.float32),
        grid_spec=pltpu.PrefetchScalarGridSpec(
            num_scalar_prefetch=0,
            grid=(n_blocks,),
            in_specs=[
                pl.BlockSpec((block_b, L, D), lambda i: (i, 0, 0)),
                pl.BlockSpec((3, D, H_pad), lambda i: (0, 0, 0)),
                pl.BlockSpec((1, H_pad), lambda i: (0, 0)),
            ],
            out_specs=pl.BlockSpec((block_b, H_pad), lambda i: (i, 0)),
        ),
        compiler_params=pltpu.CompilerParams(
            dimension_semantics=("parallel",)),
        cost_estimate=cost,
    )(x_bf, w, b)
    return out[:B, :H]


# ----------------------------------------------------------------------------
# Glue (plain JAX): embedding lookups + concat, as in network.embedding.Embedding
# ----------------------------------------------------------------------------
def embed(word, pos1, pos2, word_emb_table, pos1_emb_table, pos2_emb_table):
    we = jnp.take(word_emb_table, word, axis=0)    # (B, L, word_dim)
    p1 = jnp.take(pos1_emb_table, pos1, axis=0)    # (B, L, pos_dim)
    p2 = jnp.take(pos2_emb_table, pos2, axis=0)    # (B, L, pos_dim)
    return jnp.concatenate([we, p1, p2], axis=-1)  # (B, L, D)


def cnn_sentence_encoder_forward(inputs, params):
    x = embed(inputs["word"], inputs["pos1"], inputs["pos2"],
              params["word_emb"], params["pos1_emb"], params["pos2_emb"])
    return cnn_encoder_pallas(x, params["conv_w"], params["conv_b"])


# ----------------------------------------------------------------------------
# Pure-JAX reference (same bf16-in / f32-accumulate numerics as the kernel)
# ----------------------------------------------------------------------------
def _reference(inputs, params):
    x = embed(inputs["word"], inputs["pos1"], inputs["pos2"],
              params["word_emb"], params["pos1_emb"], params["pos2_emb"])
    x = x.astype(jnp.bfloat16)
    B, L, D = x.shape
    w = jnp.transpose(params["conv_w"], (2, 1, 0)).astype(jnp.bfloat16)  # (3, D, H)
    x_pad = jnp.pad(x, ((0, 0), (1, 1), (0, 0)))
    conv = sum(jnp.einsum("bld,dh->blh", x_pad[:, k:k + L, :], w[k],
                          preferred_element_type=jnp.float32)
               for k in range(3))
    conv = conv + params["conv_b"][None, None, :].astype(jnp.float32)
    return jnp.max(jax.nn.relu(conv), axis=1)                             # (B, H)


if __name__ == "__main__":
    key = jax.random.PRNGKey(0)

    # small, shape-consistent config
    max_length = 16          # L
    word_embedding_dim = 50
    pos_embedding_dim = 5
    hidden_size = 230        # module default H; padded to 256 lanes in-kernel
    vocab = 20               # word_vec_mat rows
    B = 8
    D = word_embedding_dim + 2 * pos_embedding_dim  # 60

    k1, k2, k3, k4, k5, k6, k7, k8 = jax.random.split(key, 8)

    # word embedding table: word_vec_mat rows + UNK + BLANK(=0, padding_idx)
    word_vec_mat = jax.random.normal(k1, (vocab, word_embedding_dim), jnp.float32)
    unk_row = jax.random.normal(k2, (1, word_embedding_dim), jnp.float32) / jnp.sqrt(
        jnp.float32(word_embedding_dim))
    blank_row = jnp.zeros((1, word_embedding_dim), jnp.float32)
    word_emb = jnp.concatenate([word_vec_mat, unk_row, blank_row], axis=0)  # (V+2, 50)

    # position embeddings (2*max_length rows, padding_idx=0 -> row 0 zeroed)
    pos1_emb = jax.random.normal(k3, (2 * max_length, pos_embedding_dim), jnp.float32)
    pos1_emb = pos1_emb.at[0].set(0.0)
    pos2_emb = jax.random.normal(k4, (2 * max_length, pos_embedding_dim), jnp.float32)
    pos2_emb = pos2_emb.at[0].set(0.0)

    # Conv1d(D -> H, kernel_size=3, padding=1) parameters (torch layout)
    conv_w = 0.1 * jax.random.normal(k5, (hidden_size, D, 3), jnp.float32)
    conv_b = 0.1 * jax.random.normal(k6, (hidden_size,), jnp.float32)

    params = dict(word_emb=word_emb, pos1_emb=pos1_emb, pos2_emb=pos2_emb,
                  conv_w=conv_w, conv_b=conv_b)

    # deterministic example inputs (as produced by tokenize(): ints in range)
    word = jax.random.randint(k7, (B, max_length), 0, vocab + 2, dtype=jnp.int32)
    pos1 = jax.random.randint(k8, (B, max_length), 0, 2 * max_length, dtype=jnp.int32)
    pos2 = (pos1 + 3) % (2 * max_length)
    inputs = dict(word=word, pos1=pos1, pos2=pos2)

    out = jax.block_until_ready(cnn_sentence_encoder_forward(inputs, params))
    ref = jax.block_until_ready(_reference(inputs, params))

    assert out.shape == (B, hidden_size)
    assert jnp.allclose(out, ref, atol=1e-3, rtol=1e-3), "kernel mismatch vs reference"

    print("KERNEL_OK")
</pallas_src>

<mosaic_0001>
module attributes {stable_mosaic.version = 11 : i64} {
  func.func @_conv_relu_maxpool_kernel(%arg0: i32, %arg1: memref<8x16x60xbf16, #tpu.memory_space<vmem>>, %arg2: memref<3x60x256xbf16, #tpu.memory_space<vmem>>, %arg3: memref<1x256xf32, #tpu.memory_space<vmem>>, %arg4: memref<8x256xf32, #tpu.memory_space<vmem>>) attributes {dimension_semantics = [#tpu.dimension_semantics<parallel>], iteration_bounds = array<i64: 1>, scalar_prefetch = 0 : i64, scratch_operands = 0 : i64, tpu.core_type = #tpu.core_type<tc>, window_params = [{transform_indices = @transform_0, window_bounds = array<i64: 8, 16, 60>}, {pipeline_mode = #tpu.pipeline_mode<synchronous>, transform_indices = @transform_1, window_bounds = array<i64: 3, 60, 256>}, {pipeline_mode = #tpu.pipeline_mode<synchronous>, transform_indices = @transform_2, window_bounds = array<i64: 1, 256>}, {transform_indices = @transform_3, window_bounds = array<i64: 8, 256>}]} {
    %c0 = arith.constant 0 : index
    %c0_0 = arith.constant 0 : index
    %c0_1 = arith.constant 0 : index
    %0 = vector.load %arg1[%c0, %c0_0, %c0_1] : memref<8x16x60xbf16, #tpu.memory_space<vmem>>, vector<8x16x60xbf16>
    %1 = vector.shape_cast %0 : vector<8x16x60xbf16> to vector<128x60xbf16>
    %c0_2 = arith.constant 0 : index
    %c0_3 = arith.constant 0 : index
    %c0_4 = arith.constant 0 : index
    %2 = vector.load %arg2[%c0_2, %c0_3, %c0_4] : memref<3x60x256xbf16, #tpu.memory_space<vmem>>, vector<1x60x256xbf16>
    %3 = vector.shape_cast %2 : vector<1x60x256xbf16> to vector<60x256xbf16>
    %cst = arith.constant dense<0.000000e+00> : vector<128x256xf32>
    %4 = tpu.matmul %1, %3, %cst {dimension_numbers = #tpu.dot_dimension_numbers<[1], [0], [0], [1], [0, 0, 1, 1], [], []>} : vector<128x60xbf16>, vector<60x256xbf16>, vector<128x256xf32> -> vector<128x256xf32>
    %c1 = arith.constant 1 : index
    %c0_5 = arith.constant 0 : index
    %c0_6 = arith.constant 0 : index
    %5 = vector.load %arg2[%c1, %c0_5, %c0_6] : memref<3x60x256xbf16, #tpu.memory_space<vmem>>, vector<1x60x256xbf16>
    %6 = vector.shape_cast %5 : vector<1x60x256xbf16> to vector<60x256xbf16>
    %cst_7 = arith.constant dense<0.000000e+00> : vector<128x256xf32>
    %7 = tpu.matmul %1, %6, %cst_7 {dimension_numbers = #tpu.dot_dimension_numbers<[1], [0], [0], [1], [0, 0, 1, 1], [], []>} : vector<128x60xbf16>, vector<60x256xbf16>, vector<128x256xf32> -> vector<128x256xf32>
    %c2 = arith.constant 2 : index
    %c0_8 = arith.constant 0 : index
    %c0_9 = arith.constant 0 : index
    %8 = vector.load %arg2[%c2, %c0_8, %c0_9] : memref<3x60x256xbf16, #tpu.memory_space<vmem>>, vector<1x60x256xbf16>
    %9 = vector.shape_cast %8 : vector<1x60x256xbf16> to vector<60x256xbf16>
    %cst_10 = arith.constant dense<0.000000e+00> : vector<128x256xf32>
    %10 = tpu.matmul %1, %9, %cst_10 {dimension_numbers = #tpu.dot_dimension_numbers<[1], [0], [0], [1], [0, 0, 1, 1], [], []>} : vector<128x60xbf16>, vector<60x256xbf16>, vector<128x256xf32> -> vector<128x256xf32>
    %cst_11 = arith.constant 0.000000e+00 : f32
    %11 = vector.broadcast %cst_11 : f32 to vector<1x256xf32>
    %12 = vector.extract_strided_slice %4 {offsets = [0, 0], sizes = [127, 256], strides = [1, 1]} : vector<128x256xf32> to vector<127x256xf32>
    %13 = tpu.concatenate %11, %12 in 0 : vector<1x256xf32>, vector<127x256xf32> -> vector<128x256xf32>
    %14 = vector.extract_strided_slice %10 {offsets = [1, 0], sizes = [127, 256], strides = [1, 1]} : vector<128x256xf32> to vector<127x256xf32>
    %15 = tpu.concatenate %14, %11 in 0 : vector<127x256xf32>, vector<1x256xf32> -> vector<128x256xf32>
    %16 = tpu.iota {dimensions = array<i32: 0>} : vector<128x1xi32>
    %c16_i32 = arith.constant 16 : i32
    %c0_i32 = arith.constant 0 : i32
    %17 = arith.cmpi eq, %c16_i32, %c0_i32 : i32
    %c1_i32 = arith.constant 1 : i32
    %18 = arith.select %17, %c1_i32, %c16_i32 : i32
    %19 = vector.broadcast %18 : i32 to vector<128x1xi32>
    %20 = arith.remsi %16, %19 : vector<128x1xi32>
    %c0_i32_12 = arith.constant 0 : i32
    %21 = vector.broadcast %c0_i32_12 : i32 to vector<128x1xi32>
    %22 = arith.cmpi ne, %20, %21 : vector<128x1xi32>
    %c0_i32_13 = arith.constant 0 : i32
    %23 = vector.broadcast %c0_i32_13 : i32 to vector<128x1xi32>
    %24 = arith.cmpi slt, %20, %23 : vector<128x1xi32>
    %c0_i32_14 = arith.constant 0 : i32
    %25 = arith.cmpi slt, %18, %c0_i32_14 : i32
    %26 = vector.broadcast %25 : i1 to vector<128x1xi1>
    %27 = vector.broadcast %26 : vector<128x1xi1> to vector<128x1xi1>
    %28 = arith.xori %24, %27 : vector<128x1xi1>
    %29 = arith.andi %28, %22 : vector<128x1xi1>
    %30 = vector.broadcast %18 : i32 to vector<128x1xi32>
    %31 = arith.addi %20, %30 : vector<128x1xi32>
    %32 = arith.select %29, %31, %20 : vector<128x1xi1>, vector<128x1xi32>
    %c0_i32_15 = arith.constant 0 : i32
    %33 = vector.broadcast %c0_i32_15 : i32 to vector<128x1xi32>
    %34 = arith.cmpi sgt, %32, %33 : vector<128x1xi32>
    %cst_16 = arith.constant 0.000000e+00 : f32
    %35 = vector.shape_cast %34 : vector<128x1xi1> to vector<128x1xi1>
    %36 = vector.broadcast %35 : vector<128x1xi1> to vector<128x256xi1>
    %37 = vector.broadcast %cst_16 : f32 to vector<128x256xf32>
    %38 = arith.select %36, %13, %37 : vector<128x256xi1>, vector<128x256xf32>
    %39 = arith.addf %7, %38 : vector<128x256xf32>
    %c15_i32 = arith.constant 15 : i32
    %40 = vector.broadcast %c15_i32 : i32 to vector<128x1xi32>
    %41 = arith.cmpi slt, %32, %40 : vector<128x1xi32>
    %cst_17 = arith.constant 0.000000e+00 : f32
    %42 = vector.shape_cast %41 : vector<128x1xi1> to vector<128x1xi1>
    %43 = vector.broadcast %42 : vector<128x1xi1> to vector<128x256xi1>
    %44 = vector.broadcast %cst_17 : f32 to vector<128x256xf32>
    %45 = arith.select %43, %15, %44 : vector<128x256xi1>, vector<128x256xf32>
    %46 = arith.addf %39, %45 : vector<128x256xf32>
    %47 = vector.shape_cast %46 : vector<128x256xf32> to vector<8x16x256xf32>
    %cst_18 = arith.constant dense<0xFF800000> : vector<8x256xf32>
    %48 = vector.multi_reduction <maximumf>, %47, %cst_18 [1] : vector<8x16x256xf32> to vector<8x256xf32>
    %c0_19 = arith.constant 0 : index
    %c0_20 = arith.constant 0 : index
    %49 = vector.load %arg3[%c0_19, %c0_20] : memref<1x256xf32, #tpu.memory_space<vmem>>, vector<1x256xf32>
    %50 = vector.broadcast %49 : vector<1x256xf32> to vector<8x256xf32>
    %51 = arith.addf %48, %50 : vector<8x256xf32>
    %cst_21 = arith.constant 0.000000e+00 : f32
    %52 = vector.broadcast %cst_21 : f32 to vector<8x256xf32>
    %53 = arith.maximumf %51, %52 : vector<8x256xf32>
    %c0_22 = arith.constant 0 : index
    %c0_23 = arith.constant 0 : index
    %54 = vector.load %arg4[%c0_22, %c0_23] : memref<8x256xf32, #tpu.memory_space<vmem>>, vector<8x256xf32>
    tpu.vector_store %arg4[%c0_22, %c0_23], %53 {strides = array<i32>} : memref<8x256xf32, #tpu.memory_space<vmem>>, vector<8x256xf32>,
    return
  }
  func.func @transform_0(%arg0: i32) -> (i32, i32, i32) {
    %c0_i32 = arith.constant 0 : i32
    %c0_i32_0 = arith.constant 0 : i32
    %c0_i32_1 = arith.constant 0 : i32
    return %arg0, %c0_i32, %c0_i32_0 : i32, i32, i32
  }
  func.func @transform_1(%arg0: i32) -> (i32, i32, i32) {
    %c0_i32 = arith.constant 0 : i32
    %c0_i32_0 = arith.constant 0 : i32
    %c0_i32_1 = arith.constant 0 : i32
    %c0_i32_2 = arith.constant 0 : i32
    return %c0_i32, %c0_i32_0, %c0_i32_1 : i32, i32, i32
  }
  func.func @transform_2(%arg0: i32) -> (i32, i32) {
    %c0_i32 = arith.constant 0 : i32
    %c0_i32_0 = arith.constant 0 : i32
    %c0_i32_1 = arith.constant 0 : i32
    return %c0_i32, %c0_i32_0 : i32, i32
  }
  func.func @transform_3(%arg0: i32) -> (i32, i32) {
    %c0_i32 = arith.constant 0 : i32
    %c0_i32_0 = arith.constant 0 : i32
    return %arg0, %c0_i32 : i32, i32
  }
}

</mosaic_0001>

<llo_original>
// kernel: tpu_custom_call.1
$region0: #{tpu_custom_call.1}
  #allocation0 [shape = 'u32[]', space=smem, size = 0x4, offset = 0x4, fixed_abs, tag = 'smem constant byte address 0x4 - core index']
  #allocation1 [shape = 'u32[144,128]{1,0:T(1,128)}', space=vmem, size = 0x12000, scoped, tag = 'internal scratch']
  %s0 = inlined_call_operand.hbm [shape: bf16[8,16,60], index: 0, kind: input, shape index: {}]
  %s1 = inlined_call_operand.hbm [shape: bf16[3,60,256], index: 1, kind: input, shape index: {}]
  %s2 = inlined_call_operand.vmem [shape: f32[1,256], index: 2, kind: input, shape index: {}]
  %s3 = inlined_call_operand.hbm [shape: f32[8,256], index: 3, kind: output, shape index: {}]
  %s4 = sld [smem:[#allocation0]]
  $region30: #{tpu_custom_call.1} parent=0
    _
  %s6 = ssub.s32 1, %s4
  %s7 = scalar_select 0, %s6, %s4
  $region1: #{tpu_custom_call.1} parent=0
    #allocation2 [shape = 'u8[32768]{0}', space=vmem, size = 0x8000, scoped, tag = 'input window, operand 0, single buffered']
    #allocation3 [shape = 's32[1]{0}', space=sflag, size = 0x4, scoped, tag = 'scoped memory for tpu_custom_call.1']
    #allocation4 [shape = 's32[1]{0}', space=sflag, size = 0x4, scoped, tag = 'scoped memory for tpu_custom_call.1']
    #allocation5 [shape = 'u8[98304]{0}', space=vmem, size = 0x18000, scoped, tag = 'input window, operand 1, single buffered']
    #allocation6 [shape = 's32[1]{0}', space=sflag, size = 0x4, scoped, tag = 'scoped memory for tpu_custom_call.1']
    #allocation7 [shape = 'u8[8192]{0}', space=vmem, size = 0x2000, scoped, tag = 'output window, operand 0, single buffered']
    %8 = vsyncpa [#allocation3], 0
    %9 = vsyncpa [#allocation6], 0
    %10 = vsyncpa [#allocation4], 0
    // Predicated region
    $region2: #{tpu_custom_call.1} parent=1 // pred_check
      _
    $region3: #{tpu_custom_call.1} parent=1 // pred_check_branch
      %12 = sbr.rel (0) target = $region5
    $region4: #{tpu_custom_call.1} parent=1 // pred_region
      %s14 = ssub.s32 1024, 1024
      %15 = vsyncadd [#allocation3], %s14
      %s16 = sshll.u32 [#allocation2], 4
      %s17 = int_to_ptr.vmem [resolvable:$true] %s16
      %22 = dma.hbm_to_vmem [thread:$0]  %s0, 1024, %s17, [#allocation3], 64, 64, 4
    $region5: #{tpu_custom_call.1} parent=1 // pred_fallthru
      _
    // Predicated region
    $region6: #{tpu_custom_call.1} parent=1 // pred_check
      _
    $region7: #{tpu_custom_call.1} parent=1 // pred_check_branch
      %24 = sbr.rel (0) target = $region9
    $region8: #{tpu_custom_call.1} parent=1 // pred_region
      %s26 = ssub.s32 3072, 3072
      %27 = vsyncadd [#allocation6], %s26
      %s28 = sshll.u32 [#allocation5], 4
      %s29 = int_to_ptr.vmem [resolvable:$true] %s28
      %34 = dma.hbm_to_vmem [thread:$0]  %s1, 3072, %s29, [#allocation6], 128, 128, 8
    $region9: #{tpu_custom_call.1} parent=1 // pred_fallthru
      _
    // Predicated region
    $region10: #{tpu_custom_call.1} parent=1 // pred_check
      _
    $region11: #{tpu_custom_call.1} parent=1 // pred_check_branch
      %36 = sbr.rel (0) target = $region13
    $region12: #{tpu_custom_call.1} parent=1 // pred_region
      _
    $region13: #{tpu_custom_call.1} parent=1 // pred_fallthru
      _
    // Predicated region
    $region14: #{tpu_custom_call.1} parent=1 // pred_check
      _
    $region15: #{tpu_custom_call.1} parent=1 // pred_check_branch
      %38 = sbr.rel (0) target = $region17
    $region16: #{tpu_custom_call.1} parent=1 // pred_region
      %39 = dma.done [#allocation3], 1024
    $region17: #{tpu_custom_call.1} parent=1 // pred_fallthru
      _
    // Predicated region
    $region18: #{tpu_custom_call.1} parent=1 // pred_check
      _
    $region19: #{tpu_custom_call.1} parent=1 // pred_check_branch
      %41 = sbr.rel (0) target = $region21
    $region20: #{tpu_custom_call.1} parent=1 // pred_region
      %42 = dma.done [#allocation6], 3072
    $region21: #{tpu_custom_call.1} parent=1 // pred_fallthru
      _
    %v44 = vld [vmem:[#allocation2] sm:$0xf]
    %v45 = vld [vmem:[#allocation2 + $0x4] sm:$0xf]
    %v46 = vld [vmem:[#allocation2 + $0x8] sm:$0xf]
    %v47 = vld [vmem:[#allocation2 + $0xc] sm:$0xf]
    %v48 = vld [vmem:[#allocation2 + $0x10] sm:$0xf]
    %v49 = vld [vmem:[#allocation2 + $0x14] sm:$0xf]
    %v50 = vld [vmem:[#allocation2 + $0x18] sm:$0xf]
    %v51 = vld [vmem:[#allocation2 + $0x1c] sm:$0xf]
    %v52 = vld [vmem:[#allocation2 + $0x20] sm:$0xf]
    %v53 = vld [vmem:[#allocation2 + $0x24] sm:$0xf]
    %v54 = vld [vmem:[#allocation2 + $0x28] sm:$0xf]
    %v55 = vld [vmem:[#allocation2 + $0x2c] sm:$0xf]
    %v56 = vld [vmem:[#allocation2 + $0x30] sm:$0xf]
    %v57 = vld [vmem:[#allocation2 + $0x34] sm:$0xf]
    %v58 = vld [vmem:[#allocation2 + $0x38] sm:$0xf]
    %v59 = vld [vmem:[#allocation2 + $0x3c] sm:$0xf]
    %v60 = vld [vmem:[#allocation5] sm:$0xff]
    %v61 = vld [vmem:[#allocation5 + $0x8] sm:$0xff]
    %v62 = vld [vmem:[#allocation5 + $0x10] sm:$0xff]
    %v63 = vld [vmem:[#allocation5 + $0x18] sm:$0xff]
    %v64 = vld [vmem:[#allocation5 + $0x20] sm:$0xff]
    %v65 = vld [vmem:[#allocation5 + $0x28] sm:$0xff]
    %v66 = vld [vmem:[#allocation5 + $0x30] sm:$0xff]
    %v67 = vld [vmem:[#allocation5 + $0x38] sm:$0x33]
    %v84 = vunpack.c.l.b16 %v44
    %v85 = vunpack.c.l.b16 %v45
    %v86 = vunpack.c.l.b16 %v46
    %v87 = vunpack.c.l.b16 %v47
    %v88 = vunpack.c.l.b16 %v48
    %v89 = vunpack.c.l.b16 %v49
    %v90 = vunpack.c.l.b16 %v50
    %v91 = vunpack.c.l.b16 %v51
    %v92 = vunpack.c.l.b16 %v52
    %v93 = vunpack.c.l.b16 %v53
    %v94 = vunpack.c.l.b16 %v54
    %v95 = vunpack.c.l.b16 %v55
    %v96 = vunpack.c.l.b16 %v56
    %v97 = vunpack.c.l.b16 %v57
    %v98 = vunpack.c.l.b16 %v58
    %v99 = vunpack.c.l.b16 %v59
    %v100 = vpack.c.b16 %v85, %v84
    %v101 = vpack.c.b16 %v87, %v86
    %v102 = vpack.c.b16 %v89, %v88
    %v103 = vpack.c.b16 %v91, %v90
    %v104 = vpack.c.b16 %v93, %v92
    %v105 = vpack.c.b16 %v95, %v94
    %v106 = vpack.c.b16 %v97, %v96
    %v107 = vpack.c.b16 %v99, %v98
    %v116 = vunpack.c.l.b16 %v60
    %v117 = vunpack.c.h.b16 %v60
    %v118 = vunpack.c.l.b16 %v61
    %v119 = vunpack.c.h.b16 %v61
    %v120 = vunpack.c.l.b16 %v62
    %v121 = vunpack.c.h.b16 %v62
    %v122 = vunpack.c.l.b16 %v63
    %v123 = vunpack.c.h.b16 %v63
    %v124 = vunpack.c.l.b16 %v64
    %v125 = vunpack.c.h.b16 %v64
    %v126 = vunpack.c.l.b16 %v65
    %v127 = vunpack.c.h.b16 %v65
    %v128 = vunpack.c.l.b16 %v66
    %v129 = vunpack.c.h.b16 %v66
    %v130 = vunpack.c.l.b16 %v67
    %v131 = vunpack.c.h.b16 %v67
    %v132 = vpack.c.b16 %v118, %v116
    %v133 = vpack.c.b16 %v119, %v117
    %v134 = vpack.c.b16 %v122, %v120
    %v135 = vpack.c.b16 %v123, %v121
    %v136 = vpack.c.b16 %v126, %v124
    %v137 = vpack.c.b16 %v127, %v125
    %v138 = vpack.c.b16 %v130, %v128
    %v139 = vpack.c.b16 %v131, %v129
    %vm146 = vcmask 490496
    %v148 = vsel %vm146, %v100, 0
    %v151 = vsel %vm146, %v101, 0
    %v154 = vsel %vm146, %v102, 0
    %v157 = vsel %vm146, %v103, 0
    %v160 = vsel %vm146, %v104, 0
    %v163 = vsel %vm146, %v105, 0
    %v166 = vsel %vm146, %v106, 0
    %v169 = vsel %vm146, %v107, 0
    %vm171 = vcmask 1045504
    %v173 = vsel %vm171, %v138, 0
    %v176 = vsel %vm171, %v139, 0
    %178 = vmatprep.subr.bf16.mxu0 0
    %179 = vmatpush1.bf16.msra.mxu0 0
    %180 = vmatprep.subr.bf16.mxu0 0
    %181 = vmatpush1.bf16.msra.mxu0 0
    %182 = vmatprep.subr.bf16.mxu0 0
    %183 = vmatpush1.bf16.msra.mxu0 0
    %184 = vmatprep.subr.bf16.mxu0 0
    %185 = vmatpush1.bf16.msra.mxu0 0
    %186 = vmatprep.subr.bf16.mxu0 %v176
    %187 = vmatpush1.bf16.msra.mxu0 %v173
    %188 = vmatprep.subr.bf16.mxu0 %v137
    %189 = vmatpush1.bf16.msra.mxu0 %v136
    %190 = vmatprep.subr.bf16.mxu0 %v135
    %191 = vmatpush1.bf16.msra.mxu0 %v134
    %192 = vmatprep.subr.bf16.mxu0 %v133
    %193 = vmatpush1.bf16.msra.mxu0 %v132
    %194 = vmatprep.subr.bf16.mxu0 0
    %195 = vmatpush2.bf16.msra.mxu0 0
    %196 = vmatprep.subr.bf16.mxu0 0
    %197 = vmatpush2.bf16.msra.mxu0 0
    %198 = vmatprep.subr.bf16.mxu0 0
    %199 = vmatpush2.bf16.msra.mxu0 0
    %200 = vmatprep.subr.bf16.mxu0 0
    %201 = vmatpush2.bf16.msra.mxu0 0
    %202 = vmatprep.subr.bf16.mxu0 0
    %203 = vmatpush2.bf16.msra.mxu0 0
    %204 = vmatprep.subr.bf16.mxu0 0
    %205 = vmatpush2.bf16.msra.mxu0 0
    %206 = vmatprep.subr.bf16.mxu0 0
    %207 = vmatpush2.bf16.msra.mxu0 0
    %208 = vmatprep.subr.bf16.mxu0 0
    %209 = vmatpush2.bf16.msra.mxu0 0
    %210 = vmatprep.mubr.bf16.mxu0 0
    %211 = vmatmul.mubr.bf16.gmra.mxu0 %v148
    %v212 = vpop.f32.mrf.mxu0
    %v213 = vadd.f32 0.0, %v212
    %v214 = vpop.f32.mrf.mxu0
    %v215 = vadd.f32 0.0, %v214
    %v216 = vpop.f32.mrf.mxu0
    %v217 = vadd.f32 0.0, %v216
    %v218 = vpop.f32.mrf.mxu0
    %v219 = vadd.f32 0.0, %v218
    %220 = vmatprep.mubr.bf16.mxu0 0
    %221 = vmatmul.mubr.bf16.gmra.mxu0 %v151
    %v222 = vpop.f32.mrf.mxu0
    %v223 = vadd.f32 0.0, %v222
    %v224 = vpop.f32.mrf.mxu0
    %v225 = vadd.f32 0.0, %v224
    %v226 = vpop.f32.mrf.mxu0
    %v227 = vadd.f32 0.0, %v226
    %v228 = vpop.f32.mrf.mxu0
    %v229 = vadd.f32 0.0, %v228
    %230 = vmatprep.mubr.bf16.mxu0 0
    %231 = vmatmul.mubr.bf16.gmra.mxu0 %v154
    %v232 = vpop.f32.mrf.mxu0
    %v233 = vadd.f32 0.0, %v232
    %v234 = vpop.f32.mrf.mxu0
    %v235 = vadd.f32 0.0, %v234
    %v236 = vpop.f32.mrf.mxu0
    %v237 = vadd.f32 0.0, %v236
    %v238 = vpop.f32.mrf.mxu0
    %v239 = vadd.f32 0.0, %v238
    %240 = vmatprep.mubr.bf16.mxu0 0
    %241 = vmatmul.mubr.bf16.gmra.mxu0 %v157
    %v242 = vpop.f32.mrf.mxu0
    %v243 = vadd.f32 0.0, %v242
    %v244 = vpop.f32.mrf.mxu0
    %v245 = vadd.f32 0.0, %v244
    %v246 = vpop.f32.mrf.mxu0
    %v247 = vadd.f32 0.0, %v246
    %v248 = vpop.f32.mrf.mxu0
    %v249 = vadd.f32 0.0, %v248
    %250 = vmatprep.mubr.bf16.mxu0 0
    %251 = vmatmul.mubr.bf16.gmra.mxu0 %v160
    %v252 = vpop.f32.mrf.mxu0
    %v253 = vadd.f32 0.0, %v252
    %v254 = vpop.f32.mrf.mxu0
    %v255 = vadd.f32 0.0, %v254
    %v256 = vpop.f32.mrf.mxu0
    %v257 = vadd.f32 0.0, %v256
    %v258 = vpop.f32.mrf.mxu0
    %v259 = vadd.f32 0.0, %v258
    %260 = vmatprep.mubr.bf16.mxu0 0
    %261 = vmatmul.mubr.bf16.gmra.mxu0 %v163
    %v262 = vpop.f32.mrf.mxu0
    %v263 = vadd.f32 0.0, %v262
    %v264 = vpop.f32.mrf.mxu0
    %v265 = vadd.f32 0.0, %v264
    %v266 = vpop.f32.mrf.mxu0
    %v267 = vadd.f32 0.0, %v266
    %v268 = vpop.f32.mrf.mxu0
    %v269 = vadd.f32 0.0, %v268
    %270 = vmatprep.mubr.bf16.mxu0 0
    %271 = vmatmul.mubr.bf16.gmra.mxu0 %v166
    %v272 = vpop.f32.mrf.mxu0
    %v273 = vadd.f32 0.0, %v272
    %v274 = vpop.f32.mrf.mxu0
    %v275 = vadd.f32 0.0, %v274
    %v276 = vpop.f32.mrf.mxu0
    %v277 = vadd.f32 0.0, %v276
    %v278 = vpop.f32.mrf.mxu0
    %v279 = vadd.f32 0.0, %v278
    %280 = vmatprep.mubr.bf16.mxu0 0
    %281 = vmatmul.mubr.bf16.gmra.mxu0 %v169
    %v282 = vpop.f32.mrf.mxu0
    %v283 = vadd.f32 0.0, %v282
    %v284 = vpop.f32.mrf.mxu0
    %v285 = vadd.f32 0.0, %v284
    %v286 = vpop.f32.mrf.mxu0
    %v287 = vadd.f32 0.0, %v286
    %v288 = vpop.f32.mrf.mxu0
    %v289 = vadd.f32 0.0, %v288
    %290 = vdwg.mxu0
    %s291 = scalar_lea.vmem [#allocation5], 64
    %v292 = vld [vmem:[%s291] sm:$0xff]
    %v293 = vld [vmem:[%s291 + $0x8] sm:$0xff]
    %v294 = vld [vmem:[%s291 + $0x10] sm:$0xff]
    %v295 = vld [vmem:[%s291 + $0x18] sm:$0xff]
    %v296 = vld [vmem:[%s291 + $0x20] sm:$0xff]
    %v297 = vld [vmem:[%s291 + $0x28] sm:$0xff]
    %v298 = vld [vmem:[%s291 + $0x30] sm:$0xff]
    %v299 = vld [vmem:[%s291 + $0x38] sm:$0x33]
    %s300 = scalar_lea.vmem [#allocation5], 128
    %v301 = vld [vmem:[%s300] sm:$0xff]
    %v302 = vld [vmem:[%s300 + $0x8] sm:$0xff]
    %v303 = vld [vmem:[%s300 + $0x10] sm:$0xff]
    %v304 = vld [vmem:[%s300 + $0x18] sm:$0xff]
    %v305 = vld [vmem:[%s300 + $0x20] sm:$0xff]
    %v306 = vld [vmem:[%s300 + $0x28] sm:$0xff]
    %v307 = vld [vmem:[%s300 + $0x30] sm:$0xff]
    %v308 = vld [vmem:[%s300 + $0x38] sm:$0x33]
    %v317 = vunpack.c.l.b16 %v301
    %v318 = vunpack.c.h.b16 %v301
    %v319 = vunpack.c.l.b16 %v302
    %v320 = vunpack.c.h.b16 %v302
    %v321 = vunpack.c.l.b16 %v303
    %v322 = vunpack.c.h.b16 %v303
    %v323 = vunpack.c.l.b16 %v304
    %v324 = vunpack.c.h.b16 %v304
    %v325 = vunpack.c.l.b16 %v305
    %v326 = vunpack.c.h.b16 %v305
    %v327 = vunpack.c.l.b16 %v306
    %v328 = vunpack.c.h.b16 %v306
    %v329 = vunpack.c.l.b16 %v307
    %v330 = vunpack.c.h.b16 %v307
    %v331 = vunpack.c.l.b16 %v308
    %v332 = vunpack.c.h.b16 %v308
    %v333 = vpack.c.b16 %v319, %v317
    %v334 = vpack.c.b16 %v320, %v318
    %v335 = vpack.c.b16 %v323, %v321
    %v336 = vpack.c.b16 %v324, %v322
    %v337 = vpack.c.b16 %v327, %v325
    %v338 = vpack.c.b16 %v328, %v326
    %v339 = vpack.c.b16 %v331, %v329
    %v340 = vpack.c.b16 %v332, %v330
    %v348 = vsel %vm171, %v339, 0
    %v351 = vsel %vm171, %v340, 0
    %353 = vmatprep.subr.bf16.mxu0 0
    %354 = vmatpush1.bf16.msra.mxu0 0
    %355 = vmatprep.subr.bf16.mxu0 0
    %356 = vmatpush1.bf16.msra.mxu0 0
    %357 = vmatprep.subr.bf16.mxu0 0
    %358 = vmatpush1.bf16.msra.mxu0 0
    %359 = vmatprep.subr.bf16.mxu0 0
    %360 = vmatpush1.bf16.msra.mxu0 0
    %361 = vmatprep.subr.bf16.mxu0 %v351
    %362 = vmatpush1.bf16.msra.mxu0 %v348
    %363 = vmatprep.subr.bf16.mxu0 %v338
    %364 = vmatpush1.bf16.msra.mxu0 %v337
    %365 = vmatprep.subr.bf16.mxu0 %v336
    %366 = vmatpush1.bf16.msra.mxu0 %v335
    %367 = vmatprep.subr.bf16.mxu0 %v334
    %368 = vmatpush1.bf16.msra.mxu0 %v333
    %369 = vmatprep.subr.bf16.mxu0 0
    %370 = vmatpush2.bf16.msra.mxu0 0
    %371 = vmatprep.subr.bf16.mxu0 0
    %372 = vmatpush2.bf16.msra.mxu0 0
    %373 = vmatprep.subr.bf16.mxu0 0
    %374 = vmatpush2.bf16.msra.mxu0 0
    %375 = vmatprep.subr.bf16.mxu0 0
    %376 = vmatpush2.bf16.msra.mxu0 0
    %377 = vmatprep.subr.bf16.mxu0 0
    %378 = vmatpush2.bf16.msra.mxu0 0
    %379 = vmatprep.subr.bf16.mxu0 0
    %380 = vmatpush2.bf16.msra.mxu0 0
    %381 = vmatprep.subr.bf16.mxu0 0
    %382 = vmatpush2.bf16.msra.mxu0 0
    %383 = vmatprep.subr.bf16.mxu0 0
    %384 = vmatpush2.bf16.msra.mxu0 0
    %385 = vmatprep.mubr.bf16.mxu0 0
    %386 = vmatmul.mubr.bf16.gmra.mxu0 %v148
    %v387 = vpop.f32.mrf.mxu0
    %v388 = vadd.f32 0.0, %v387
    %v389 = vpop.f32.mrf.mxu0
    %v390 = vadd.f32 0.0, %v389
    %v391 = vpop.f32.mrf.mxu0
    %v392 = vadd.f32 0.0, %v391
    %v393 = vpop.f32.mrf.mxu0
    %v394 = vadd.f32 0.0, %v393
    %395 = vmatprep.mubr.bf16.mxu0 0
    %396 = vmatmul.mubr.bf16.gmra.mxu0 %v151
    %v397 = vpop.f32.mrf.mxu0
    %v398 = vadd.f32 0.0, %v397
    %v399 = vpop.f32.mrf.mxu0
    %v400 = vadd.f32 0.0, %v399
    %v401 = vpop.f32.mrf.mxu0
    %v402 = vadd.f32 0.0, %v401
    %v403 = vpop.f32.mrf.mxu0
    %v404 = vadd.f32 0.0, %v403
    %405 = vmatprep.mubr.bf16.mxu0 0
    %406 = vmatmul.mubr.bf16.gmra.mxu0 %v154
    %v407 = vpop.f32.mrf.mxu0
    %v408 = vadd.f32 0.0, %v407
    %v409 = vpop.f32.mrf.mxu0
    %v410 = vadd.f32 0.0, %v409
    %v411 = vpop.f32.mrf.mxu0
    %v412 = vadd.f32 0.0, %v411
    %v413 = vpop.f32.mrf.mxu0
    %v414 = vadd.f32 0.0, %v413
    %415 = vmatprep.mubr.bf16.mxu0 0
    %416 = vmatmul.mubr.bf16.gmra.mxu0 %v157
    %v417 = vpop.f32.mrf.mxu0
    %v418 = vadd.f32 0.0, %v417
    %v419 = vpop.f32.mrf.mxu0
    %v420 = vadd.f32 0.0, %v419
    %v421 = vpop.f32.mrf.mxu0
    %v422 = vadd.f32 0.0, %v421
    %v423 = vpop.f32.mrf.mxu0
    %v424 = vadd.f32 0.0, %v423
    %425 = vmatprep.mubr.bf16.mxu0 0
    %426 = vmatmul.mubr.bf16.gmra.mxu0 %v160
    %v427 = vpop.f32.mrf.mxu0
    %v428 = vadd.f32 0.0, %v427
    %v429 = vpop.f32.mrf.mxu0
    %v430 = vadd.f32 0.0, %v429
    %v431 = vpop.f32.mrf.mxu0
    %v432 = vadd.f32 0.0, %v431
    %v433 = vpop.f32.mrf.mxu0
    %v434 = vadd.f32 0.0, %v433
    %435 = vmatprep.mubr.bf16.mxu0 0
    %436 = vmatmul.mubr.bf16.gmra.mxu0 %v163
    %v437 = vpop.f32.mrf.mxu0
    %v438 = vadd.f32 0.0, %v437
    %v439 = vpop.f32.mrf.mxu0
    %v440 = vadd.f32 0.0, %v439
    %v441 = vpop.f32.mrf.mxu0
    %v442 = vadd.f32 0.0, %v441
    %v443 = vpop.f32.mrf.mxu0
    %v444 = vadd.f32 0.0, %v443
    %445 = vmatprep.mubr.bf16.mxu0 0
    %446 = vmatmul.mubr.bf16.gmra.mxu0 %v166
    %v447 = vpop.f32.mrf.mxu0
    %v448 = vadd.f32 0.0, %v447
    %v449 = vpop.f32.mrf.mxu0
    %v450 = vadd.f32 0.0, %v449
    %v451 = vpop.f32.mrf.mxu0
    %v452 = vadd.f32 0.0, %v451
    %v453 = vpop.f32.mrf.mxu0
    %v454 = vadd.f32 0.0, %v453
    %455 = vmatprep.mubr.bf16.mxu0 0
    %456 = vmatmul.mubr.bf16.gmra.mxu0 %v169
    %v457 = vpop.f32.mrf.mxu0
    %v458 = vadd.f32 0.0, %v457
    %v459 = vpop.f32.mrf.mxu0
    %v460 = vadd.f32 0.0, %v459
    %v461 = vpop.f32.mrf.mxu0
    %v462 = vadd.f32 0.0, %v461
    %v463 = vpop.f32.mrf.mxu0
    %v464 = vadd.f32 0.0, %v463
    %465 = vdwg.mxu0
    %vm498 = vcmask 1040384
    %v499 = vrot.slane %v213, 7
    %v500 = vrot.slane %v215, 7
    %v501 = vrot.slane %v217, 7
    %v502 = vsel %vm498, %v499, %v501
    %v503 = vrot.slane %v219, 7
    %v504 = vsel %vm498, %v500, %v503
    %v505 = vrot.slane %v223, 7
    %v506 = vsel %vm498, %v501, %v505
    %v507 = vrot.slane %v225, 7
    %v508 = vsel %vm498, %v503, %v507
    %v509 = vrot.slane %v227, 7
    %v510 = vsel %vm498, %v505, %v509
    %v511 = vrot.slane %v229, 7
    %v512 = vsel %vm498, %v507, %v511
    %v513 = vrot.slane %v233, 7
    %v514 = vsel %vm498, %v509, %v513
    %v515 = vrot.slane %v235, 7
    %v516 = vsel %vm498, %v511, %v515
    %v517 = vrot.slane %v237, 7
    %v518 = vsel %vm498, %v513, %v517
    %v519 = vrot.slane %v239, 7
    %v520 = vsel %vm498, %v515, %v519
    %v521 = vrot.slane %v243, 7
    %v522 = vsel %vm498, %v517, %v521
    %v523 = vrot.slane %v245, 7
    %v524 = vsel %vm498, %v519, %v523
    %v525 = vrot.slane %v247, 7
    %v526 = vsel %vm498, %v521, %v525
    %v527 = vrot.slane %v249, 7
    %v528 = vsel %vm498, %v523, %v527
    %v529 = vrot.slane %v253, 7
    %v530 = vsel %vm498, %v525, %v529
    %v531 = vrot.slane %v255, 7
    %v532 = vsel %vm498, %v527, %v531
    %v533 = vrot.slane %v257, 7
    %v534 = vsel %vm498, %v529, %v533
    %v535 = vrot.slane %v259, 7
    %v536 = vsel %vm498, %v531, %v535
    %v537 = vrot.slane %v263, 7
    %v538 = vsel %vm498, %v533, %v537
    %v539 = vrot.slane %v265, 7
    %v540 = vsel %vm498, %v535, %v539
    %v541 = vrot.slane %v267, 7
    %v542 = vsel %vm498, %v537, %v541
    %v543 = vrot.slane %v269, 7
    %v544 = vsel %vm498, %v539, %v543
    %v545 = vrot.slane %v273, 7
    %v546 = vsel %vm498, %v541, %v545
    %v547 = vrot.slane %v275, 7
    %v548 = vsel %vm498, %v543, %v547
    %v549 = vrot.slane %v277, 7
    %v550 = vsel %vm498, %v545, %v549
    %v551 = vrot.slane %v279, 7
    %v552 = vsel %vm498, %v547, %v551
    %v553 = vrot.slane %v283, 7
    %v554 = vsel %vm498, %v549, %v553
    %v555 = vrot.slane %v285, 7
    %v556 = vsel %vm498, %v551, %v555
    %v557 = vrot.slane %v287, 7
    %v558 = vsel %vm498, %v553, %v557
    %v559 = vrot.slane %v289, 7
    %v560 = vsel %vm498, %v555, %v559
    %v593 = vsel %vm498, 0.0, %v499
    %v594 = vsel %vm498, 0.0, %v500
    %vm627 = vcmask 1046528
    %v628 = vrot.slane %v388, 1
    %v629 = vrot.slane %v392, 1
    %v630 = vsel %vm627, %v628, %v629
    %v631 = vrot.slane %v390, 1
    %v632 = vrot.slane %v394, 1
    %v633 = vsel %vm627, %v631, %v632
    %v634 = vrot.slane %v398, 1
    %v635 = vsel %vm627, %v629, %v634
    %v636 = vrot.slane %v400, 1
    %v637 = vsel %vm627, %v632, %v636
    %v638 = vrot.slane %v402, 1
    %v639 = vsel %vm627, %v634, %v638
    %v640 = vrot.slane %v404, 1
    %v641 = vsel %vm627, %v636, %v640
    %v642 = vrot.slane %v408, 1
    %v643 = vsel %vm627, %v638, %v642
    %v644 = vrot.slane %v410, 1
    %v645 = vsel %vm627, %v640, %v644
    %v646 = vrot.slane %v412, 1
    %v647 = vsel %vm627, %v642, %v646
    %v648 = vrot.slane %v414, 1
    %v649 = vsel %vm627, %v644, %v648
    %v650 = vrot.slane %v418, 1
    %v651 = vsel %vm627, %v646, %v650
    %v652 = vrot.slane %v420, 1
    %v653 = vsel %vm627, %v648, %v652
    %v654 = vrot.slane %v422, 1
    %v655 = vsel %vm627, %v650, %v654
    %v656 = vrot.slane %v424, 1
    %v657 = vsel %vm627, %v652, %v656
    %v658 = vrot.slane %v428, 1
    %v659 = vsel %vm627, %v654, %v658
    %v660 = vrot.slane %v430, 1
    %v661 = vsel %vm627, %v656, %v660
    %v662 = vrot.slane %v432, 1
    %v663 = vsel %vm627, %v658, %v662
    %v664 = vrot.slane %v434, 1
    %v665 = vsel %vm627, %v660, %v664
    %v666 = vrot.slane %v438, 1
    %v667 = vsel %vm627, %v662, %v666
    %v668 = vrot.slane %v440, 1
    %v669 = vsel %vm627, %v664, %v668
    %v670 = vrot.slane %v442, 1
    %v671 = vsel %vm627, %v666, %v670
    %v672 = vrot.slane %v444, 1
    %v673 = vsel %vm627, %v668, %v672
    %v674 = vrot.slane %v448, 1
    %v675 = vsel %vm627, %v670, %v674
    %v676 = vrot.slane %v450, 1
    %v677 = vsel %vm627, %v672, %v676
    %v678 = vrot.slane %v452, 1
    %v679 = vsel %vm627, %v674, %v678
    %v680 = vrot.slane %v454, 1
    %v681 = vsel %vm627, %v676, %v680
    %v682 = vrot.slane %v458, 1
    %v683 = vsel %vm627, %v678, %v682
    %v684 = vrot.slane %v460, 1
    %v685 = vsel %vm627, %v680, %v684
    %v686 = vrot.slane %v462, 1
    %v687 = vsel %vm627, %v682, %v686
    %v688 = vrot.slane %v464, 1
    %v689 = vsel %vm627, %v684, %v688
    %v722 = vsel %vm627, %v686, 0.0
    %v723 = vsel %vm627, %v688, 0.0
    %v724 = vlaneseq
    %v725 = vshrl.u32 %v724, 7
    %v726 = vadd.s32 %v725, 8
    %v727 = vadd.s32 %v725, 16
    %v728 = vadd.s32 %v725, 24
    %v729 = vadd.s32 %v725, 32
    %v730 = vadd.s32 %v725, 40
    %v731 = vadd.s32 %v725, 48
    %v732 = vadd.s32 %v725, 56
    %v733 = vadd.s32 %v725, 64
    %v734 = vadd.s32 %v725, 72
    %v735 = vadd.s32 %v725, 80
    %v736 = vadd.s32 %v725, 88
    %v737 = vadd.s32 %v725, 96
    %v738 = vadd.s32 %v725, 104
    %v739 = vadd.s32 %v725, 112
    %v740 = vadd.s32 %v725, 120
    %vm741 = vcmp.lt.s32.totalorder %v725, 0
    %v742 = vsub.s32 0, %v725
    %v743 = vsel %vm741, %v742, %v725
    %v744 = vshrl.u32 %v743, 4
    %v745 = vand.u32 %v743, 15
    %v746 = vsub.s32 0, %v745
    %v747 = vsel %vm741, %v746, %v745
    %vm748 = vcmp.lt.s32.totalorder %v726, 0
    %v749 = vsub.s32 0, %v726
    %v750 = vsel %vm748, %v749, %v726
    %v751 = vshrl.u32 %v750, 4
    %v752 = vand.u32 %v750, 15
    %v753 = vsub.s32 0, %v752
    %v754 = vsel %vm748, %v753, %v752
    %vm755 = vcmp.lt.s32.totalorder %v727, 0
    %v756 = vsub.s32 0, %v727
    %v757 = vsel %vm755, %v756, %v727
    %v758 = vshrl.u32 %v757, 4
    %v759 = vand.u32 %v757, 15
    %v760 = vsub.s32 0, %v759
    %v761 = vsel %vm755, %v760, %v759
    %vm762 = vcmp.lt.s32.totalorder %v728, 0
    %v763 = vsub.s32 0, %v728
    %v764 = vsel %vm762, %v763, %v728
    %v765 = vshrl.u32 %v764, 4
    %v766 = vand.u32 %v764, 15
    %v767 = vsub.s32 0, %v766
    %v768 = vsel %vm762, %v767, %v766
    %vm769 = vcmp.lt.s32.totalorder %v729, 0
    %v770 = vsub.s32 0, %v729
    %v771 = vsel %vm769, %v770, %v729
    %v772 = vshrl.u32 %v771, 4
    %v773 = vand.u32 %v771, 15
    %v774 = vsub.s32 0, %v773
    %v775 = vsel %vm769, %v774, %v773
    %vm776 = vcmp.lt.s32.totalorder %v730, 0
    %v777 = vsub.s32 0, %v730
    %v778 = vsel %vm776, %v777, %v730
    %v779 = vshrl.u32 %v778, 4
    %v780 = vand.u32 %v778, 15
    %v781 = vsub.s32 0, %v780
    %v782 = vsel %vm776, %v781, %v780
    %vm783 = vcmp.lt.s32.totalorder %v731, 0
    %v784 = vsub.s32 0, %v731
    %v785 = vsel %vm783, %v784, %v731
    %v786 = vshrl.u32 %v785, 4
    %v787 = vand.u32 %v785, 15
    %v788 = vsub.s32 0, %v787
    %v789 = vsel %vm783, %v788, %v787
    %vm790 = vcmp.lt.s32.totalorder %v732, 0
    %v791 = vsub.s32 0, %v732
    %v792 = vsel %vm790, %v791, %v732
    %v793 = vshrl.u32 %v792, 4
    %v794 = vand.u32 %v792, 15
    %v795 = vsub.s32 0, %v794
    %v796 = vsel %vm790, %v795, %v794
    %vm797 = vcmp.lt.s32.totalorder %v733, 0
    %v798 = vsub.s32 0, %v733
    %v799 = vsel %vm797, %v798, %v733
    %v800 = vshrl.u32 %v799, 4
    %v801 = vand.u32 %v799, 15
    %v802 = vsub.s32 0, %v801
    %v803 = vsel %vm797, %v802, %v801
    %vm804 = vcmp.lt.s32.totalorder %v734, 0
    %v805 = vsub.s32 0, %v734
    %v806 = vsel %vm804, %v805, %v734
    %v807 = vshrl.u32 %v806, 4
    %v808 = vand.u32 %v806, 15
    %v809 = vsub.s32 0, %v808
    %v810 = vsel %vm804, %v809, %v808
    %vm811 = vcmp.lt.s32.totalorder %v735, 0
    %v812 = vsub.s32 0, %v735
    %v813 = vsel %vm811, %v812, %v735
    %v814 = vshrl.u32 %v813, 4
    %v815 = vand.u32 %v813, 15
    %v816 = vsub.s32 0, %v815
    %v817 = vsel %vm811, %v816, %v815
    %vm818 = vcmp.lt.s32.totalorder %v736, 0
    %v819 = vsub.s32 0, %v736
    %v820 = vsel %vm818, %v819, %v736
    %v821 = vshrl.u32 %v820, 4
    %v822 = vand.u32 %v820, 15
    %v823 = vsub.s32 0, %v822
    %v824 = vsel %vm818, %v823, %v822
    %vm825 = vcmp.lt.s32.totalorder %v737, 0
    %v826 = vsub.s32 0, %v737
    %v827 = vsel %vm825, %v826, %v737
    %v828 = vshrl.u32 %v827, 4
    %v829 = vand.u32 %v827, 15
    %v830 = vsub.s32 0, %v829
    %v831 = vsel %vm825, %v830, %v829
    %vm832 = vcmp.lt.s32.totalorder %v738, 0
    %v833 = vsub.s32 0, %v738
    %v834 = vsel %vm832, %v833, %v738
    %v835 = vshrl.u32 %v834, 4
    %v836 = vand.u32 %v834, 15
    %v837 = vsub.s32 0, %v836
    %v838 = vsel %vm832, %v837, %v836
    %vm839 = vcmp.lt.s32.totalorder %v739, 0
    %v840 = vsub.s32 0, %v739
    %v841 = vsel %vm839, %v840, %v739
    %v842 = vshrl.u32 %v841, 4
    %v843 = vand.u32 %v841, 15
    %v844 = vsub.s32 0, %v843
    %v845 = vsel %vm839, %v844, %v843
    %vm846 = vcmp.lt.s32.totalorder %v740, 0
    %v847 = vsub.s32 0, %v740
    %v848 = vsel %vm846, %v847, %v740
    %v849 = vshrl.u32 %v848, 4
    %v850 = vand.u32 %v848, 15
    %v851 = vsub.s32 0, %v850
    %v852 = vsel %vm846, %v851, %v850
    %vm853 = vcmp.ne.s32.totalorder %v747, 0
    %vm854 = vcmp.ne.s32.totalorder %v754, 0
    %vm855 = vcmp.ne.s32.totalorder %v761, 0
    %vm856 = vcmp.ne.s32.totalorder %v768, 0
    %vm857 = vcmp.ne.s32.totalorder %v775, 0
    %vm858 = vcmp.ne.s32.totalorder %v782, 0
    %vm859 = vcmp.ne.s32.totalorder %v789, 0
    %vm860 = vcmp.ne.s32.totalorder %v796, 0
    %vm861 = vcmp.ne.s32.totalorder %v803, 0
    %vm862 = vcmp.ne.s32.totalorder %v810, 0
    %vm863 = vcmp.ne.s32.totalorder %v817, 0
    %vm864 = vcmp.ne.s32.totalorder %v824, 0
    %vm865 = vcmp.ne.s32.totalorder %v831, 0
    %vm866 = vcmp.ne.s32.totalorder %v838, 0
    %vm867 = vcmp.ne.s32.totalorder %v845, 0
    %vm868 = vcmp.ne.s32.totalorder %v852, 0
    %vm869 = vcmp.lt.s32.totalorder %v747, 0
    %vm870 = vcmp.lt.s32.totalorder %v754, 0
    %vm871 = vcmp.lt.s32.totalorder %v761, 0
    %vm872 = vcmp.lt.s32.totalorder %v768, 0
    %vm873 = vcmp.lt.s32.totalorder %v775, 0
    %vm874 = vcmp.lt.s32.totalorder %v782, 0
    %vm875 = vcmp.lt.s32.totalorder %v789, 0
    %vm876 = vcmp.lt.s32.totalorder %v796, 0
    %vm877 = vcmp.lt.s32.totalorder %v803, 0
    %vm878 = vcmp.lt.s32.totalorder %v810, 0
    %vm879 = vcmp.lt.s32.totalorder %v817, 0
    %vm880 = vcmp.lt.s32.totalorder %v824, 0
    %vm881 = vcmp.lt.s32.totalorder %v831, 0
    %vm882 = vcmp.lt.s32.totalorder %v838, 0
    %vm883 = vcmp.lt.s32.totalorder %v845, 0
    %vm884 = vcmp.lt.s32.totalorder %v852, 0
    %vm885 = vmand %vm869, %vm853
    %vm886 = vmand %vm870, %vm854
    %vm887 = vmand %vm871, %vm855
    %vm888 = vmand %vm872, %vm856
    %vm889 = vmand %vm873, %vm857
    %vm890 = vmand %vm874, %vm858
    %vm891 = vmand %vm875, %vm859
    %vm892 = vmand %vm876, %vm860
    %vm893 = vmand %vm877, %vm861
    %vm894 = vmand %vm878, %vm862
    %vm895 = vmand %vm879, %vm863
    %vm896 = vmand %vm880, %vm864
    %vm897 = vmand %vm881, %vm865
    %vm898 = vmand %vm882, %vm866
    %vm899 = vmand %vm883, %vm867
    %vm900 = vmand %vm884, %vm868
    %v901 = vadd.s32 %v747, 16
    %v902 = vadd.s32 %v754, 16
    %v903 = vadd.s32 %v761, 16
    %v904 = vadd.s32 %v768, 16
    %v905 = vadd.s32 %v775, 16
    %v906 = vadd.s32 %v782, 16
    %v907 = vadd.s32 %v789, 16
    %v908 = vadd.s32 %v796, 16
    %v909 = vadd.s32 %v803, 16
    %v910 = vadd.s32 %v810, 16
    %v911 = vadd.s32 %v817, 16
    %v912 = vadd.s32 %v824, 16
    %v913 = vadd.s32 %v831, 16
    %v914 = vadd.s32 %v838, 16
    %v915 = vadd.s32 %v845, 16
    %v916 = vadd.s32 %v852, 16
    %v917 = vsel %vm885, %v901, %v747
    %v918 = vsel %vm886, %v902, %v754
    %v919 = vsel %vm887, %v903, %v761
    %v920 = vsel %vm888, %v904, %v768
    %v921 = vsel %vm889, %v905, %v775
    %v922 = vsel %vm890, %v906, %v782
    %v923 = vsel %vm891, %v907, %v789
    %v924 = vsel %vm892, %v908, %v796
    %v925 = vsel %vm893, %v909, %v803
    %v926 = vsel %vm894, %v910, %v810
    %v927 = vsel %vm895, %v911, %v817
    %v928 = vsel %vm896, %v912, %v824
    %v929 = vsel %vm897, %v913, %v831
    %v930 = vsel %vm898, %v914, %v838
    %v931 = vsel %vm899, %v915, %v845
    %v932 = vsel %vm900, %v916, %v852
    %vm933 = vcmp.gt.s32.totalorder %v917, 0
    %vm934 = vcmp.gt.s32.totalorder %v918, 0
    %vm935 = vcmp.gt.s32.totalorder %v919, 0
    %vm936 = vcmp.gt.s32.totalorder %v920, 0
    %vm937 = vcmp.gt.s32.totalorder %v921, 0
    %vm938 = vcmp.gt.s32.totalorder %v922, 0
    %vm939 = vcmp.gt.s32.totalorder %v923, 0
    %vm940 = vcmp.gt.s32.totalorder %v924, 0
    %vm941 = vcmp.gt.s32.totalorder %v925, 0
    %vm942 = vcmp.gt.s32.totalorder %v926, 0
    %vm943 = vcmp.gt.s32.totalorder %v927, 0
    %vm944 = vcmp.gt.s32.totalorder %v928, 0
    %vm945 = vcmp.gt.s32.totalorder %v929, 0
    %vm946 = vcmp.gt.s32.totalorder %v930, 0
    %vm947 = vcmp.gt.s32.totalorder %v931, 0
    %vm948 = vcmp.gt.s32.totalorder %v932, 0
    %v949 = vsel %vm933, 1, 0
    %v950 = vsel %vm934, 1, 0
    %v951 = vsel %vm935, 1, 0
    %v952 = vsel %vm936, 1, 0
    %v953 = vsel %vm937, 1, 0
    %v954 = vsel %vm938, 1, 0
    %v955 = vsel %vm939, 1, 0
    %v956 = vsel %vm940, 1, 0
    %v957 = vsel %vm941, 1, 0
    %v958 = vsel %vm942, 1, 0
    %v959 = vsel %vm943, 1, 0
    %v960 = vsel %vm944, 1, 0
    %v961 = vsel %vm945, 1, 0
    %v962 = vsel %vm946, 1, 0
    %v963 = vsel %vm947, 1, 0
    %v964 = vsel %vm948, 1, 0
    %vm965 = vcmp.eq.s32.totalorder %v949, 1
    %vm966 = vcmp.eq.s32.totalorder %v950, 1
    %vm967 = vcmp.eq.s32.totalorder %v951, 1
    %vm968 = vcmp.eq.s32.totalorder %v952, 1
    %vm969 = vcmp.eq.s32.totalorder %v953, 1
    %vm970 = vcmp.eq.s32.totalorder %v954, 1
    %vm971 = vcmp.eq.s32.totalorder %v955, 1
    %vm972 = vcmp.eq.s32.totalorder %v956, 1
    %vm973 = vcmp.eq.s32.totalorder %v957, 1
    %vm974 = vcmp.eq.s32.totalorder %v958, 1
    %vm975 = vcmp.eq.s32.totalorder %v959, 1
    %vm976 = vcmp.eq.s32.totalorder %v960, 1
    %vm977 = vcmp.eq.s32.totalorder %v961, 1
    %vm978 = vcmp.eq.s32.totalorder %v962, 1
    %vm979 = vcmp.eq.s32.totalorder %v963, 1
    %vm980 = vcmp.eq.s32.totalorder %v964, 1
    %v981 = vsel %vm965, %v593, 0.0
    %v982 = vsel %vm965, %v594, 0.0
    %v983 = vsel %vm966, %v502, 0.0
    %v984 = vsel %vm966, %v504, 0.0
    %v985 = vsel %vm967, %v506, 0.0
    %v986 = vsel %vm967, %v508, 0.0
    %v987 = vsel %vm968, %v510, 0.0
    %v988 = vsel %vm968, %v512, 0.0
    %v989 = vsel %vm969, %v514, 0.0
    %v990 = vsel %vm969, %v516, 0.0
    %v991 = vsel %vm970, %v518, 0.0
    %v992 = vsel %vm970, %v520, 0.0
    %v993 = vsel %vm971, %v522, 0.0
    %v994 = vsel %vm971, %v524, 0.0
    %v995 = vsel %vm972, %v526, 0.0
    %v996 = vsel %vm972, %v528, 0.0
    %v997 = vsel %vm973, %v530, 0.0
    %v998 = vsel %vm973, %v532, 0.0
    %v999 = vsel %vm974, %v534, 0.0
    %v1000 = vsel %vm974, %v536, 0.0
    %v1001 = vsel %vm975, %v538, 0.0
    %v1002 = vsel %vm975, %v540, 0.0
    %v1003 = vsel %vm976, %v542, 0.0
    %v1004 = vsel %vm976, %v544, 0.0
    %v1005 = vsel %vm977, %v546, 0.0
    %v1006 = vsel %vm977, %v548, 0.0
    %v1007 = vsel %vm978, %v550, 0.0
    %v1008 = vsel %vm978, %v552, 0.0
    %v1009 = vsel %vm979, %v554, 0.0
    %v1010 = vsel %vm979, %v556, 0.0
    %v1011 = vsel %vm980, %v558, 0.0
    %v1012 = vsel %vm980, %v560, 0.0
    %v1021 = vunpack.c.l.b16 %v292
    %v1022 = vunpack.c.h.b16 %v292
    %v1023 = vunpack.c.l.b16 %v293
    %v1024 = vunpack.c.h.b16 %v293
    %v1025 = vunpack.c.l.b16 %v294
    %v1026 = vunpack.c.h.b16 %v294
    %v1027 = vunpack.c.l.b16 %v295
    %v1028 = vunpack.c.h.b16 %v295
    %v1029 = vunpack.c.l.b16 %v296
    %v1030 = vunpack.c.h.b16 %v296
    %v1031 = vunpack.c.l.b16 %v297
    %v1032 = vunpack.c.h.b16 %v297
    %v1033 = vunpack.c.l.b16 %v298
    %v1034 = vunpack.c.h.b16 %v298
    %v1035 = vunpack.c.l.b16 %v299
    %v1036 = vunpack.c.h.b16 %v299
    %v1037 = vpack.c.b16 %v1023, %v1021
    %v1038 = vpack.c.b16 %v1024, %v1022
    %v1039 = vpack.c.b16 %v1027, %v1025
    %v1040 = vpack.c.b16 %v1028, %v1026
    %v1041 = vpack.c.b16 %v1031, %v1029
    %v1042 = vpack.c.b16 %v1032, %v1030
    %v1043 = vpack.c.b16 %v1035, %v1033
    %v1044 = vpack.c.b16 %v1036, %v1034
    %v1052 = vsel %vm171, %v1043, 0
    %v1055 = vsel %vm171, %v1044, 0
    %1057 = vmatprep.subr.bf16.mxu0 0
    %1058 = vmatpush1.bf16.msra.mxu0 0
    %1059 = vmatprep.subr.bf16.mxu0 0
    %1060 = vmatpush1.bf16.msra.mxu0 0
    %1061 = vmatprep.subr.bf16.mxu0 0
    %1062 = vmatpush1.bf16.msra.mxu0 0
    %1063 = vmatprep.subr.bf16.mxu0 0
    %1064 = vmatpush1.bf16.msra.mxu0 0
    %1065 = vmatprep.subr.bf16.mxu0 %v1055
    %1066 = vmatpush1.bf16.msra.mxu0 %v1052
    %1067 = vmatprep.subr.bf16.mxu0 %v1042
    %1068 = vmatpush1.bf16.msra.mxu0 %v1041
    %1069 = vmatprep.subr.bf16.mxu0 %v1040
    %1070 = vmatpush1.bf16.msra.mxu0 %v1039
    %1071 = vmatprep.subr.bf16.mxu0 %v1038
    %1072 = vmatpush1.bf16.msra.mxu0 %v1037
    %1073 = vmatprep.subr.bf16.mxu0 0
    %1074 = vmatpush2.bf16.msra.mxu0 0
    %1075 = vmatprep.subr.bf16.mxu0 0
    %1076 = vmatpush2.bf16.msra.mxu0 0
    %1077 = vmatprep.subr.bf16.mxu0 0
    %1078 = vmatpush2.bf16.msra.mxu0 0
    %1079 = vmatprep.subr.bf16.mxu0 0
    %1080 = vmatpush2.bf16.msra.mxu0 0
    %1081 = vmatprep.subr.bf16.mxu0 0
    %1082 = vmatpush2.bf16.msra.mxu0 0
    %1083 = vmatprep.subr.bf16.mxu0 0
    %1084 = vmatpush2.bf16.msra.mxu0 0
    %1085 = vmatprep.subr.bf16.mxu0 0
    %1086 = vmatpush2.bf16.msra.mxu0 0
    %1087 = vmatprep.subr.bf16.mxu0 0
    %1088 = vmatpush2.bf16.msra.mxu0 0
    %1089 = vmatprep.mubr.bf16.mxu0 0
    %1090 = vmatmul.mubr.bf16.gmra.mxu0 %v148
    %v1091 = vpop.f32.mrf.mxu0
    %v1092 = vadd.f32 %v981, %v1091
    %v1093 = vpop.f32.mrf.mxu0
    %v1094 = vadd.f32 %v982, %v1093
    %v1095 = vpop.f32.mrf.mxu0
    %v1096 = vadd.f32 %v983, %v1095
    %v1097 = vpop.f32.mrf.mxu0
    %v1098 = vadd.f32 %v984, %v1097
    %1099 = vmatprep.mubr.bf16.mxu0 0
    %1100 = vmatmul.mubr.bf16.gmra.mxu0 %v151
    %v1101 = vpop.f32.mrf.mxu0
    %v1102 = vadd.f32 %v985, %v1101
    %v1103 = vpop.f32.mrf.mxu0
    %v1104 = vadd.f32 %v986, %v1103
    %v1105 = vpop.f32.mrf.mxu0
    %v1106 = vadd.f32 %v987, %v1105
    %v1107 = vpop.f32.mrf.mxu0
    %v1108 = vadd.f32 %v988, %v1107
    %1109 = vmatprep.mubr.bf16.mxu0 0
    %1110 = vmatmul.mubr.bf16.gmra.mxu0 %v154
    %v1111 = vpop.f32.mrf.mxu0
    %v1112 = vadd.f32 %v989, %v1111
    %v1113 = vpop.f32.mrf.mxu0
    %v1114 = vadd.f32 %v990, %v1113
    %v1115 = vpop.f32.mrf.mxu0
    %v1116 = vadd.f32 %v991, %v1115
    %v1117 = vpop.f32.mrf.mxu0
    %v1118 = vadd.f32 %v992, %v1117
    %1119 = vmatprep.mubr.bf16.mxu0 0
    %1120 = vmatmul.mubr.bf16.gmra.mxu0 %v157
    %v1121 = vpop.f32.mrf.mxu0
    %v1122 = vadd.f32 %v993, %v1121
    %v1123 = vpop.f32.mrf.mxu0
    %v1124 = vadd.f32 %v994, %v1123
    %v1125 = vpop.f32.mrf.mxu0
    %v1126 = vadd.f32 %v995, %v1125
    %v1127 = vpop.f32.mrf.mxu0
    %v1128 = vadd.f32 %v996, %v1127
    %1129 = vmatprep.mubr.bf16.mxu0 0
    %1130 = vmatmul.mubr.bf16.gmra.mxu0 %v160
    %v1131 = vpop.f32.mrf.mxu0
    %v1132 = vadd.f32 %v997, %v1131
    %v1133 = vpop.f32.mrf.mxu0
    %v1134 = vadd.f32 %v998, %v1133
    %v1135 = vpop.f32.mrf.mxu0
    %v1136 = vadd.f32 %v999, %v1135
    %v1137 = vpop.f32.mrf.mxu0
    %v1138 = vadd.f32 %v1000, %v1137
    %1139 = vmatprep.mubr.bf16.mxu0 0
    %1140 = vmatmul.mubr.bf16.gmra.mxu0 %v163
    %v1141 = vpop.f32.mrf.mxu0
    %v1142 = vadd.f32 %v1001, %v1141
    %v1143 = vpop.f32.mrf.mxu0
    %v1144 = vadd.f32 %v1002, %v1143
    %v1145 = vpop.f32.mrf.mxu0
    %v1146 = vadd.f32 %v1003, %v1145
    %v1147 = vpop.f32.mrf.mxu0
    %v1148 = vadd.f32 %v1004, %v1147
    %1149 = vmatprep.mubr.bf16.mxu0 0
    %1150 = vmatmul.mubr.bf16.gmra.mxu0 %v166
    %v1151 = vpop.f32.mrf.mxu0
    %v1152 = vadd.f32 %v1005, %v1151
    %v1153 = vpop.f32.mrf.mxu0
    %v1154 = vadd.f32 %v1006, %v1153
    %v1155 = vpop.f32.mrf.mxu0
    %v1156 = vadd.f32 %v1007, %v1155
    %v1157 = vpop.f32.mrf.mxu0
    %v1158 = vadd.f32 %v1008, %v1157
    %1159 = vmatprep.mubr.bf16.mxu0 0
    %1160 = vmatmul.mubr.bf16.gmra.mxu0 %v169
    %v1161 = vpop.f32.mrf.mxu0
    %v1162 = vadd.f32 %v1009, %v1161
    %v1163 = vpop.f32.mrf.mxu0
    %v1164 = vadd.f32 %v1010, %v1163
    %v1165 = vpop.f32.mrf.mxu0
    %v1166 = vadd.f32 %v1011, %v1165
    %v1167 = vpop.f32.mrf.mxu0
    %v1168 = vadd.f32 %v1012, %v1167
    %1169 = vdwg.mxu0
    %vm1170 = vcmp.lt.s32.totalorder %v917, 15
    %vm1171 = vcmp.lt.s32.totalorder %v918, 15
    %vm1172 = vcmp.lt.s32.totalorder %v919, 15
    %vm1173 = vcmp.lt.s32.totalorder %v920, 15
    %vm1174 = vcmp.lt.s32.totalorder %v921, 15
    %vm1175 = vcmp.lt.s32.totalorder %v922, 15
    %vm1176 = vcmp.lt.s32.totalorder %v923, 15
    %vm1177 = vcmp.lt.s32.totalorder %v924, 15
    %vm1178 = vcmp.lt.s32.totalorder %v925, 15
    %vm1179 = vcmp.lt.s32.totalorder %v926, 15
    %vm1180 = vcmp.lt.s32.totalorder %v927, 15
    %vm1181 = vcmp.lt.s32.totalorder %v928, 15
    %vm1182 = vcmp.lt.s32.totalorder %v929, 15
    %vm1183 = vcmp.lt.s32.totalorder %v930, 15
    %vm1184 = vcmp.lt.s32.totalorder %v931, 15
    %vm1185 = vcmp.lt.s32.totalorder %v932, 15
    %v1186 = vsel %vm1170, 1, 0
    %v1187 = vsel %vm1171, 1, 0
    %v1188 = vsel %vm1172, 1, 0
    %v1189 = vsel %vm1173, 1, 0
    %v1190 = vsel %vm1174, 1, 0
    %v1191 = vsel %vm1175, 1, 0
    %v1192 = vsel %vm1176, 1, 0
    %v1193 = vsel %vm1177, 1, 0
    %v1194 = vsel %vm1178, 1, 0
    %v1195 = vsel %vm1179, 1, 0
    %v1196 = vsel %vm1180, 1, 0
    %v1197 = vsel %vm1181, 1, 0
    %v1198 = vsel %vm1182, 1, 0
    %v1199 = vsel %vm1183, 1, 0
    %v1200 = vsel %vm1184, 1, 0
    %v1201 = vsel %vm1185, 1, 0
    %vm1202 = vcmp.eq.s32.totalorder %v1186, 1
    %vm1203 = vcmp.eq.s32.totalorder %v1187, 1
    %vm1204 = vcmp.eq.s32.totalorder %v1188, 1
    %vm1205 = vcmp.eq.s32.totalorder %v1189, 1
    %vm1206 = vcmp.eq.s32.totalorder %v1190, 1
    %vm1207 = vcmp.eq.s32.totalorder %v1191, 1
    %vm1208 = vcmp.eq.s32.totalorder %v1192, 1
    %vm1209 = vcmp.eq.s32.totalorder %v1193, 1
    %vm1210 = vcmp.eq.s32.totalorder %v1194, 1
    %vm1211 = vcmp.eq.s32.totalorder %v1195, 1
    %vm1212 = vcmp.eq.s32.totalorder %v1196, 1
    %vm1213 = vcmp.eq.s32.totalorder %v1197, 1
    %vm1214 = vcmp.eq.s32.totalorder %v1198, 1
    %vm1215 = vcmp.eq.s32.totalorder %v1199, 1
    %vm1216 = vcmp.eq.s32.totalorder %v1200, 1
    %vm1217 = vcmp.eq.s32.totalorder %v1201, 1
    %v1218 = vsel %vm1202, %v630, 0.0
    %v1219 = vsel %vm1202, %v633, 0.0
    %v1220 = vsel %vm1203, %v635, 0.0
    %v1221 = vsel %vm1203, %v637, 0.0
    %v1222 = vsel %vm1204, %v639, 0.0
    %v1223 = vsel %vm1204, %v641, 0.0
    %v1224 = vsel %vm1205, %v643, 0.0
    %v1225 = vsel %vm1205, %v645, 0.0
    %v1226 = vsel %vm1206, %v647, 0.0
    %v1227 = vsel %vm1206, %v649, 0.0
    %v1228 = vsel %vm1207, %v651, 0.0
    %v1229 = vsel %vm1207, %v653, 0.0
    %v1230 = vsel %vm1208, %v655, 0.0
    %v1231 = vsel %vm1208, %v657, 0.0
    %v1232 = vsel %vm1209, %v659, 0.0
    %v1233 = vsel %vm1209, %v661, 0.0
    %v1234 = vsel %vm1210, %v663, 0.0
    %v1235 = vsel %vm1210, %v665, 0.0
    %v1236 = vsel %vm1211, %v667, 0.0
    %v1237 = vsel %vm1211, %v669, 0.0
    %v1238 = vsel %vm1212, %v671, 0.0
    %v1239 = vsel %vm1212, %v673, 0.0
    %v1240 = vsel %vm1213, %v675, 0.0
    %v1241 = vsel %vm1213, %v677, 0.0
    %v1242 = vsel %vm1214, %v679, 0.0
    %v1243 = vsel %vm1214, %v681, 0.0
    %v1244 = vsel %vm1215, %v683, 0.0
    %v1245 = vsel %vm1215, %v685, 0.0
    %v1246 = vsel %vm1216, %v687, 0.0
    %v1247 = vsel %vm1216, %v689, 0.0
    %v1248 = vsel %vm1217, %v722, 0.0
    %v1249 = vsel %vm1217, %v723, 0.0
    %v1250 = vadd.f32 %v1092, %v1218
    %v1251 = vadd.f32 %v1094, %v1219
    %v1252 = vadd.f32 %v1096, %v1220
    %v1253 = vadd.f32 %v1098, %v1221
    %v1254 = vadd.f32 %v1102, %v1222
    %v1255 = vadd.f32 %v1104, %v1223
    %v1256 = vadd.f32 %v1106, %v1224
    %v1257 = vadd.f32 %v1108, %v1225
    %v1258 = vadd.f32 %v1112, %v1226
    %v1259 = vadd.f32 %v1114, %v1227
    %v1260 = vadd.f32 %v1116, %v1228
    %v1261 = vadd.f32 %v1118, %v1229
    %v1262 = vadd.f32 %v1122, %v1230
    %v1263 = vadd.f32 %v1124, %v1231
    %v1264 = vadd.f32 %v1126, %v1232
    %v1265 = vadd.f32 %v1128, %v1233
    %v1266 = vadd.f32 %v1132, %v1234
    %v1267 = vadd.f32 %v1134, %v1235
    %v1268 = vadd.f32 %v1136, %v1236
    %v1269 = vadd.f32 %v1138, %v1237
    %v1270 = vadd.f32 %v1142, %v1238
    %v1271 = vadd.f32 %v1144, %v1239
    %v1272 = vadd.f32 %v1146, %v1240
    %v1273 = vadd.f32 %v1148, %v1241
    %v1274 = vadd.f32 %v1152, %v1242
    %v1275 = vadd.f32 %v1154, %v1243
    %v1276 = vadd.f32 %v1156, %v1244
    %v1277 = vadd.f32 %v1158, %v1245
    %v1278 = vadd.f32 %v1162, %v1246
    %v1279 = vadd.f32 %v1164, %v1247
    %v1280 = vadd.f32 %v1166, %v1248
    %v1281 = vadd.f32 %v1168, %v1249
    %v1282 = vmax.f32 %v1250, %v1252
    %v1283 = vrot.slane %v1282, 4
    %v1284 = vmax.f32 %v1282, %v1283
    %v1285 = vrot.slane %v1284, 2
    %v1286 = vmax.f32 %v1284, %v1285
    %v1287 = vrot.slane %v1286, 1
    %v1288 = vmax.f32 %v1286, %v1287
    %v1289 = vmax.f32 %v1251, %v1253
    %v1290 = vrot.slane %v1289, 4
    %v1291 = vmax.f32 %v1289, %v1290
    %v1292 = vrot.slane %v1291, 2
    %v1293 = vmax.f32 %v1291, %v1292
    %v1294 = vrot.slane %v1293, 1
    %v1295 = vmax.f32 %v1293, %v1294
    %v1296 = vmax.f32 %v1254, %v1256
    %v1297 = vrot.slane %v1296, 4
    %v1298 = vmax.f32 %v1296, %v1297
    %v1299 = vrot.slane %v1298, 2
    %v1300 = vmax.f32 %v1298, %v1299
    %v1301 = vrot.slane %v1300, 1
    %v1302 = vmax.f32 %v1300, %v1301
    %v1303 = vmax.f32 %v1255, %v1257
    %v1304 = vrot.slane %v1303, 4
    %v1305 = vmax.f32 %v1303, %v1304
    %v1306 = vrot.slane %v1305, 2
    %v1307 = vmax.f32 %v1305, %v1306
    %v1308 = vrot.slane %v1307, 1
    %v1309 = vmax.f32 %v1307, %v1308
    %v1310 = vmax.f32 %v1258, %v1260
    %v1311 = vrot.slane %v1310, 4
    %v1312 = vmax.f32 %v1310, %v1311
    %v1313 = vrot.slane %v1312, 2
    %v1314 = vmax.f32 %v1312, %v1313
    %v1315 = vrot.slane %v1314, 1
    %v1316 = vmax.f32 %v1314, %v1315
    %v1317 = vmax.f32 %v1259, %v1261
    %v1318 = vrot.slane %v1317, 4
    %v1319 = vmax.f32 %v1317, %v1318
    %v1320 = vrot.slane %v1319, 2
    %v1321 = vmax.f32 %v1319, %v1320
    %v1322 = vrot.slane %v1321, 1
    %v1323 = vmax.f32 %v1321, %v1322
    %v1324 = vmax.f32 %v1262, %v1264
    %v1325 = vrot.slane %v1324, 4
    %v1326 = vmax.f32 %v1324, %v1325
    %v1327 = vrot.slane %v1326, 2
    %v1328 = vmax.f32 %v1326, %v1327
    %v1329 = vrot.slane %v1328, 1
    %v1330 = vmax.f32 %v1328, %v1329
    %v1331 = vmax.f32 %v1263, %v1265
    %v1332 = vrot.slane %v1331, 4
    %v1333 = vmax.f32 %v1331, %v1332
    %v1334 = vrot.slane %v1333, 2
    %v1335 = vmax.f32 %v1333, %v1334
    %v1336 = vrot.slane %v1335, 1
    %v1337 = vmax.f32 %v1335, %v1336
    %v1338 = vmax.f32 %v1266, %v1268
    %v1339 = vrot.slane %v1338, 4
    %v1340 = vmax.f32 %v1338, %v1339
    %v1341 = vrot.slane %v1340, 2
    %v1342 = vmax.f32 %v1340, %v1341
    %v1343 = vrot.slane %v1342, 1
    %v1344 = vmax.f32 %v1342, %v1343
    %v1345 = vmax.f32 %v1267, %v1269
    %v1346 = vrot.slane %v1345, 4
    %v1347 = vmax.f32 %v1345, %v1346
    %v1348 = vrot.slane %v1347, 2
    %v1349 = vmax.f32 %v1347, %v1348
    %v1350 = vrot.slane %v1349, 1
    %v1351 = vmax.f32 %v1349, %v1350
    %v1352 = vmax.f32 %v1270, %v1272
    %v1353 = vrot.slane %v1352, 4
    %v1354 = vmax.f32 %v1352, %v1353
    %v1355 = vrot.slane %v1354, 2
    %v1356 = vmax.f32 %v1354, %v1355
    %v1357 = vrot.slane %v1356, 1
    %v1358 = vmax.f32 %v1356, %v1357
    %v1359 = vmax.f32 %v1271, %v1273
    %v1360 = vrot.slane %v1359, 4
    %v1361 = vmax.f32 %v1359, %v1360
    %v1362 = vrot.slane %v1361, 2
    %v1363 = vmax.f32 %v1361, %v1362
    %v1364 = vrot.slane %v1363, 1
    %v1365 = vmax.f32 %v1363, %v1364
    %v1366 = vmax.f32 %v1274, %v1276
    %v1367 = vrot.slane %v1366, 4
    %v1368 = vmax.f32 %v1366, %v1367
    %v1369 = vrot.slane %v1368, 2
    %v1370 = vmax.f32 %v1368, %v1369
    %v1371 = vrot.slane %v1370, 1
    %v1372 = vmax.f32 %v1370, %v1371
    %v1373 = vmax.f32 %v1275, %v1277
    %v1374 = vrot.slane %v1373, 4
    %v1375 = vmax.f32 %v1373, %v1374
    %v1376 = vrot.slane %v1375, 2
    %v1377 = vmax.f32 %v1375, %v1376
    %v1378 = vrot.slane %v1377, 1
    %v1379 = vmax.f32 %v1377, %v1378
    %v1380 = vmax.f32 %v1278, %v1280
    %v1381 = vrot.slane %v1380, 4
    %v1382 = vmax.f32 %v1380, %v1381
    %v1383 = vrot.slane %v1382, 2
    %v1384 = vmax.f32 %v1382, %v1383
    %v1385 = vrot.slane %v1384, 1
    %v1386 = vmax.f32 %v1384, %v1385
    %v1387 = vmax.f32 %v1279, %v1281
    %v1388 = vrot.slane %v1387, 4
    %v1389 = vmax.f32 %v1387, %v1388
    %v1390 = vrot.slane %v1389, 2
    %v1391 = vmax.f32 %v1389, %v1390
    %v1392 = vrot.slane %v1391, 1
    %v1393 = vmax.f32 %v1391, %v1392
    %v1394 = vld [vmem:[%s2] sm:$0x3]
    %v1396 = vlaneseq
    %v1397 = vshrl.u32 %v1396, 7
    %v1398 = vsub.s32 0, %v1397
    %v1399 = vrot.slane %v1394, %v1398
    %v1400 = vlaneseq
    %v1401 = vshrl.u32 %v1400, 7
    %v1402 = vsub.s32 1, %v1401
    %v1403 = vrot.slane %v1394, %v1402
    %v1406 = vadd.f32 %v1288, %v1399
    %v1407 = vadd.f32 %v1295, %v1403
    %v1408 = vadd.f32 %v1302, %v1399
    %v1409 = vadd.f32 %v1309, %v1403
    %v1410 = vadd.f32 %v1316, %v1399
    %v1411 = vadd.f32 %v1323, %v1403
    %v1412 = vadd.f32 %v1330, %v1399
    %v1413 = vadd.f32 %v1337, %v1403
    %v1414 = vadd.f32 %v1344, %v1399
    %v1415 = vadd.f32 %v1351, %v1403
    %v1416 = vadd.f32 %v1358, %v1399
    %v1417 = vadd.f32 %v1365, %v1403
    %v1418 = vadd.f32 %v1372, %v1399
    %v1419 = vadd.f32 %v1379, %v1403
    %v1420 = vadd.f32 %v1386, %v1399
    %v1421 = vadd.f32 %v1393, %v1403
    %v1422 = vmax.f32 %v1406, 0.0
    %v1423 = vmax.f32 %v1407, 0.0
    %v1424 = vmax.f32 %v1408, 0.0
    %v1425 = vmax.f32 %v1409, 0.0
    %v1426 = vmax.f32 %v1410, 0.0
    %v1427 = vmax.f32 %v1411, 0.0
    %v1428 = vmax.f32 %v1412, 0.0
    %v1429 = vmax.f32 %v1413, 0.0
    %v1430 = vmax.f32 %v1414, 0.0
    %v1431 = vmax.f32 %v1415, 0.0
    %v1432 = vmax.f32 %v1416, 0.0
    %v1433 = vmax.f32 %v1417, 0.0
    %v1434 = vmax.f32 %v1418, 0.0
    %v1435 = vmax.f32 %v1419, 0.0
    %v1436 = vmax.f32 %v1420, 0.0
    %v1437 = vmax.f32 %v1421, 0.0
    %v1454 = vrot.slane %v1424, 7
    %vm1455 = vcmask 1041409
    %v1456 = vsel %vm1455, %v1454, %v1422
    %v1457 = vrot.slane %v1426, 6
    %vm1458 = vcmask 1042434
    %v1459 = vsel %vm1458, %v1457, %v1456
    %v1460 = vrot.slane %v1428, 5
    %vm1461 = vcmask 1043459
    %v1462 = vsel %vm1461, %v1460, %v1459
    %v1463 = vrot.slane %v1430, 4
    %vm1464 = vcmask 1044484
    %v1465 = vsel %vm1464, %v1463, %v1462
    %v1466 = vrot.slane %v1432, 3
    %vm1467 = vcmask 1045509
    %v1468 = vsel %vm1467, %v1466, %v1465
    %v1469 = vrot.slane %v1434, 2
    %vm1470 = vcmask 1046534
    %v1471 = vsel %vm1470, %v1469, %v1468
    %v1472 = vrot.slane %v1436, 1
    %vm1473 = vcmask 1047559
    %v1474 = vsel %vm1473, %v1472, %v1471
    %v1475 = vrot.slane %v1425, 7
    %v1476 = vsel %vm1455, %v1475, %v1423
    %v1477 = vrot.slane %v1427, 6
    %v1478 = vsel %vm1458, %v1477, %v1476
    %v1479 = vrot.slane %v1429, 5
    %v1480 = vsel %vm1461, %v1479, %v1478
    %v1481 = vrot.slane %v1431, 4
    %v1482 = vsel %vm1464, %v1481, %v1480
    %v1483 = vrot.slane %v1433, 3
    %v1484 = vsel %vm1467, %v1483, %v1482
    %v1485 = vrot.slane %v1435, 2
    %v1486 = vsel %vm1470, %v1485, %v1484
    %v1487 = vrot.slane %v1437, 1
    %v1488 = vsel %vm1473, %v1487, %v1486
    %1491 = vst [vmem:[#allocation7] sm:$0xff] %v1474
    %1492 = vst [vmem:[#allocation7 + $0x8] sm:$0xff] %v1488
    // Predicated region
    $region22: #{tpu_custom_call.1} parent=1 // pred_check
      _
    $region23: #{tpu_custom_call.1} parent=1 // pred_check_branch
      %1494 = sbr.rel (0) target = $region25
    $region24: #{tpu_custom_call.1} parent=1 // pred_region
      %s1496 = ssub.s32 256, 256
      %1497 = vsyncadd [#allocation4], %s1496
      %s1499 = sshll.u32 [#allocation7], 4
      %s1500 = int_to_ptr.vmem [resolvable:$true] %s1499
      %1502 = dma.vmem_to_hbm [thread:$0]  %s1500, 256, %s3, [#allocation4]
    $region25: #{tpu_custom_call.1} parent=1 // pred_fallthru
      _
    // Predicated region
    $region26: #{tpu_custom_call.1} parent=1 // pred_check
      _
    $region27: #{tpu_custom_call.1} parent=1 // pred_check_branch
      %1504 = sbr.rel (0) target = $region29
    $region28: #{tpu_custom_call.1} parent=1 // pred_region
      %1505 = dma.done [#allocation4], 256
    $region29: #{tpu_custom_call.1} parent=1 // pred_fallthru
      _
    %1506 = vsyncpa [#allocation3], 1
    %1507 = vsyncpa [#allocation6], 1
    %1508 = vsyncpa [#allocation4], 1

</llo_original>
